<compile_context>
chip_gen: v7x
topology: tpu7x:2x2x1
jax: 0.10.0
libtpu: 0.0.40
codegen_flags: <defaults>
</compile_context>

<pallas_src>
import math

import jax
import jax.numpy as jnp
from jax.experimental import pallas as pl
from jax.experimental.pallas import tpu as pltpu


# ----------------------------- Pallas kernel -----------------------------

def _drop_path_kernel(scale_ref, x_ref, o_ref):
    # scale_ref: (TR, 1) per-row scale (0.0 or 1/keep_prob), already in x.dtype
    # x_ref/o_ref: (TR, L) sublane/lane-dense tile of the row-folded activations
    o_ref[...] = x_ref[...] * scale_ref[...]


# --------------------------- tiling heuristics ---------------------------

def _choose_lane_width(F):
    """Largest lane-dense width in {512,256,128} dividing F; else pad needed."""
    for L in (512, 256, 128):
        if F % L == 0:
            return L, False
    return 128, True


def _choose_row_tile(total_rows, L, itemsize):
    """Row-tile sized by bytes: ~0.5–2 MiB per block buffer, multiple of 8 rows."""
    total_bytes = total_rows * L * itemsize
    block_bytes = min(2 * 1024 * 1024, max(512 * 1024, total_bytes // 16))
    tr = max(1, (block_bytes // itemsize) // L)
    tr = max(8, (tr // 8) * 8)
    if tr >= total_rows:
        tr = total_rows  # full extent is always legal, even if not a multiple of 8
    return tr


# ------------------------------ public API ------------------------------

def drop_path(x, drop_prob: float = 0.0, training: bool = False, *, key=None):
    """Stochastic-depth per sample. Mirrors the PyTorch `drop_path` reference."""
    if drop_prob == 0.0 or not training:
        return x
    if key is None:
        raise ValueError("a jax.random key is required when training with drop_prob > 0")
    if drop_prob >= 1.0:
        # Reference math would produce x/0 * 0 = NaN; return the sensible limit.
        return jnp.zeros_like(x)

    keep_prob = 1.0 - float(drop_prob)
    orig_shape = x.shape
    B = orig_shape[0]
    F = int(math.prod(orig_shape[1:])) if len(orig_shape) > 1 else 1

    x2 = x.reshape(B, F)
    L, need_pad = _choose_lane_width(F)
    if need_pad:
        F_pad = pl.cdiv(F, 128) * 128
        for cand in (512, 256):
            if F_pad % cand == 0:
                L = cand
                break
        x2 = jnp.pad(x2, ((0, 0), (0, F_pad - F)))
    else:
        F_pad = F

    R = F_pad // L                      # rows per sample
    total_rows = B * R
    x_rows = x2.reshape(total_rows, L)  # contiguous row-major fold -> free reshape

    # Per-sample mask & scale, hoisted out of the kernel (torch.rand analogue).
    r = jax.random.uniform(key, (B,), dtype=jnp.float32)
    scale_b = (jnp.floor(keep_prob + r) / keep_prob).astype(x.dtype)   # 0 or 1/keep
    scale_rows = jnp.repeat(scale_b, R).reshape(total_rows, 1)

    itemsize = jnp.dtype(x.dtype).itemsize
    tr = _choose_row_tile(total_rows, L, itemsize)
    grid = (pl.cdiv(total_rows, tr),)   # partial last block is masked by Pallas

    out_rows = pl.pallas_call(
        _drop_path_kernel,
        out_shape=jax.ShapeDtypeStruct((total_rows, L), x.dtype),
        grid=grid,
        in_specs=[
            pl.BlockSpec((tr, 1), lambda i: (i, 0)),   # tiny per-row scale column
            pl.BlockSpec((tr, L), lambda i: (i, 0)),   # dense activation tile
        ],
        out_specs=pl.BlockSpec((tr, L), lambda i: (i, 0)),
        compiler_params=pltpu.CompilerParams(
            dimension_semantics=("parallel",),          # shard row tiles across TCs
            vmem_limit_bytes=32 * 1024 * 1024,
        ),
        cost_estimate=pl.CostEstimate(
            flops=total_rows * L,
            transcendentals=0,
            bytes_accessed=2 * total_rows * L * itemsize + total_rows * itemsize,
        ),
    )(scale_rows, x_rows)

    out = out_rows.reshape(B, F_pad)
    if need_pad:
        out = out[:, :F]
    return out.reshape(orig_shape)


class DropPath:
    """Functional stand-in for the nn.Module: DropPath(p)(x, key=...)."""

    def __init__(self, drop_prob=None):
        self.drop_prob = 0.0 if drop_prob is None else float(drop_prob)
        self.training = True

    def __call__(self, x, *, key=None):
        return drop_path(x, self.drop_prob, self.training, key=key)


# ----------------------------------- main -----------------------------------

if __name__ == "__main__":
    key = jax.random.PRNGKey(0)
    kx, kr = jax.random.split(key)

    B, C, H, W = 2, 4, 16, 16
    x = jax.random.normal(kx, (B, C, H, W), jnp.float32)

    drop_prob = 0.3
    keep_prob = 1.0 - drop_prob

    # Training path: runs the Pallas kernel.
    module = DropPath(drop_prob)          # module.training = True
    out = jax.block_until_ready(module(x, key=kr))

    # Pure-JAX reference using the same per-sample uniforms.
    r = jax.random.uniform(kr, (B,), dtype=jnp.float32)
    mask = jnp.floor(keep_prob + r).reshape(B, 1, 1, 1)
    ref = x * mask / keep_prob

    assert out.shape == x.shape
    assert bool(jnp.all(jnp.isfinite(out)))
    assert jnp.allclose(out, ref, rtol=1e-5, atol=1e-6)

    # Eval-mode / zero-prob paths are exact identity (no kernel launched).
    assert jnp.array_equal(drop_path(x, 0.0, training=False), x)
    assert jnp.array_equal(drop_path(x, drop_prob, training=False), x)

    # Also exercise a feature count that is NOT a multiple of 128 (pad path).
    x_odd = jax.random.normal(kx, (3, 5, 7, 9), jnp.float32)
    out_odd = jax.block_until_ready(drop_path(x_odd, drop_prob, True, key=kr))
    r3 = jax.random.uniform(kr, (3,), dtype=jnp.float32)
    ref_odd = x_odd * jnp.floor(keep_prob + r3).reshape(3, 1, 1, 1) / keep_prob
    assert jnp.allclose(out_odd, ref_odd, rtol=1e-5, atol=1e-6)

    print("KERNEL_OK")
</pallas_src>

<mosaic_0001>
module attributes {stable_mosaic.version = 11 : i64} {
  func.func @_drop_path_kernel(%arg0: i32, %arg1: memref<4x1xf32, #tpu.memory_space<vmem>>, %arg2: memref<4x512xf32, #tpu.memory_space<vmem>>, %arg3: memref<4x512xf32, #tpu.memory_space<vmem>>) attributes {dimension_semantics = [#tpu.dimension_semantics<parallel>], iteration_bounds = array<i64: 1>, scalar_prefetch = 0 : i64, scratch_operands = 0 : i64, tpu.core_type = #tpu.core_type<tc>, window_params = [{transform_indices = @transform_0, window_bounds = array<i64: 4, 1>}, {transform_indices = @transform_1, window_bounds = array<i64: 4, 512>}, {transform_indices = @transform_2, window_bounds = array<i64: 4, 512>}]} {
    %c0 = arith.constant 0 : index
    %c0_0 = arith.constant 0 : index
    %0 = vector.load %arg2[%c0, %c0_0] : memref<4x512xf32, #tpu.memory_space<vmem>>, vector<4x512xf32>
    %c0_1 = arith.constant 0 : index
    %c0_2 = arith.constant 0 : index
    %1 = vector.load %arg1[%c0_1, %c0_2] : memref<4x1xf32, #tpu.memory_space<vmem>>, vector<4x1xf32>
    %2 = vector.broadcast %1 : vector<4x1xf32> to vector<4x512xf32>
    %3 = arith.mulf %0, %2 : vector<4x512xf32>
    %c0_3 = arith.constant 0 : index
    %c0_4 = arith.constant 0 : index
    %4 = vector.load %arg3[%c0_3, %c0_4] : memref<4x512xf32, #tpu.memory_space<vmem>>, vector<4x512xf32>
    tpu.vector_store %arg3[%c0_3, %c0_4], %3 {strides = array<i32>} : memref<4x512xf32, #tpu.memory_space<vmem>>, vector<4x512xf32>,
    return
  }
  func.func @transform_0(%arg0: i32) -> (i32, i32) {
    %c0_i32 = arith.constant 0 : i32
    %c0_i32_0 = arith.constant 0 : i32
    return %arg0, %c0_i32 : i32, i32
  }
  func.func @transform_1(%arg0: i32) -> (i32, i32) {
    %c0_i32 = arith.constant 0 : i32
    %c0_i32_0 = arith.constant 0 : i32
    return %arg0, %c0_i32 : i32, i32
  }
  func.func @transform_2(%arg0: i32) -> (i32, i32) {
    %c0_i32 = arith.constant 0 : i32
    %c0_i32_0 = arith.constant 0 : i32
    return %arg0, %c0_i32 : i32, i32
  }
}

</mosaic_0001>

<llo_original>
// kernel: tpu_custom_call.1
$region0: #{tpu_custom_call.1}
  #allocation0 [shape = 'u32[]', space=smem, size = 0x4, offset = 0x4, fixed_abs, tag = 'smem constant byte address 0x4 - core index']
  #allocation1 [shape = 'u32[144,128]{1,0:T(1,128)}', space=vmem, size = 0x12000, scoped, tag = 'internal scratch']
  %s0 = inlined_call_operand.vmem [shape: f32[4,1], index: 0, kind: input, shape index: {}]
  %s1 = inlined_call_operand.hbm [shape: f32[4,512], index: 1, kind: input, shape index: {}]
  %s2 = inlined_call_operand.hbm [shape: f32[4,512], index: 2, kind: output, shape index: {}]
  %s3 = sld [smem:[#allocation0]]
  $region22: #{tpu_custom_call.1} parent=0
    _
  %s5 = ssub.s32 1, %s3
  %s6 = scalar_select 0, %s5, %s3
  $region1: #{tpu_custom_call.1} parent=0
    #allocation2 [shape = 'u8[8192]{0}', space=vmem, size = 0x2000, scoped, tag = 'input window, operand 1, single buffered']
    #allocation3 [shape = 's32[1]{0}', space=sflag, size = 0x4, scoped, tag = 'scoped memory for tpu_custom_call.1']
    #allocation4 [shape = 's32[1]{0}', space=sflag, size = 0x4, scoped, tag = 'scoped memory for tpu_custom_call.1']
    #allocation5 [shape = 'u8[8192]{0}', space=vmem, size = 0x2000, scoped, tag = 'output window, operand 0, single buffered']
    %7 = vsyncpa [#allocation3], 0
    %8 = vsyncpa [#allocation4], 0
    // Predicated region
    $region2: #{tpu_custom_call.1} parent=1 // pred_check
      _
    $region3: #{tpu_custom_call.1} parent=1 // pred_check_branch
      %10 = sbr.rel (0) target = $region5
    $region4: #{tpu_custom_call.1} parent=1 // pred_region
      _
    $region5: #{tpu_custom_call.1} parent=1 // pred_fallthru
      _
    // Predicated region
    $region6: #{tpu_custom_call.1} parent=1 // pred_check
      _
    $region7: #{tpu_custom_call.1} parent=1 // pred_check_branch
      %12 = sbr.rel (0) target = $region9
    $region8: #{tpu_custom_call.1} parent=1 // pred_region
      %s14 = ssub.s32 256, 256
      %15 = vsyncadd [#allocation3], %s14
      %s17 = sshll.u32 [#allocation2], 4
      %s18 = int_to_ptr.vmem [resolvable:$true] %s17
      %20 = dma.hbm_to_vmem [thread:$0]  %s1, 256, %s18, [#allocation3]
    $region9: #{tpu_custom_call.1} parent=1 // pred_fallthru
      _
    // Predicated region
    $region10: #{tpu_custom_call.1} parent=1 // pred_check
      _
    $region11: #{tpu_custom_call.1} parent=1 // pred_check_branch
      %22 = sbr.rel (0) target = $region13
    $region12: #{tpu_custom_call.1} parent=1 // pred_region
      %23 = dma.done [#allocation3], 256
    $region13: #{tpu_custom_call.1} parent=1 // pred_fallthru
      _
    %v24 = vld [vmem:[#allocation2] sm:$0xff]
    %v25 = vld [vmem:[#allocation2 + $0x8] sm:$0xff]
    %v26 = vld [vmem:[%s0] sm:$0xf]
    %28 = vset.pattern.permute.xlu0 0
    %29 = vperm.xlu0 %28, %v26
    %v30 = vpop.permute.xlu0 %29
    %v32 = vunpack.c.l.s4 839922192
    %v33 = vunpack.c.0.s8 %v32
    %v34 = vlaneseq
    %v35 = vshrl.u32 %v34, 7
    %v36 = vsub.s32 %v33, %v35
    %v37 = vrot.slane %v30, %v36
    %v39 = vmul.f32 %v24, %v37
    %v40 = vmul.f32 %v25, %v37
    %41 = vst [vmem:[#allocation5] sm:$0xff] %v39
    %42 = vst [vmem:[#allocation5 + $0x8] sm:$0xff] %v40
    // Predicated region
    $region14: #{tpu_custom_call.1} parent=1 // pred_check
      _
    $region15: #{tpu_custom_call.1} parent=1 // pred_check_branch
      %44 = sbr.rel (0) target = $region17
    $region16: #{tpu_custom_call.1} parent=1 // pred_region
      %s46 = ssub.s32 256, 256
      %47 = vsyncadd [#allocation4], %s46
      %s49 = sshll.u32 [#allocation5], 4
      %s50 = int_to_ptr.vmem [resolvable:$true] %s49
      %52 = dma.vmem_to_hbm [thread:$0]  %s50, 256, %s2, [#allocation4]
    $region17: #{tpu_custom_call.1} parent=1 // pred_fallthru
      _
    // Predicated region
    $region18: #{tpu_custom_call.1} parent=1 // pred_check
      _
    $region19: #{tpu_custom_call.1} parent=1 // pred_check_branch
      %54 = sbr.rel (0) target = $region21
    $region20: #{tpu_custom_call.1} parent=1 // pred_region
      %55 = dma.done [#allocation4], 256
    $region21: #{tpu_custom_call.1} parent=1 // pred_fallthru
      _
    %56 = vsyncpa [#allocation3], 1
    %57 = vsyncpa [#allocation4], 1

</llo_original>
